<compile_context>
chip_gen: v7x
topology: tpu7x:2x2x1
jax: 0.10.0
libtpu: 0.0.40
codegen_flags: <defaults>
</compile_context>

<pallas_src>
import functools

import jax
import jax.numpy as jnp
import numpy as np
from jax import lax
from jax.experimental import pallas as pl
from jax.experimental.pallas import tpu as pltpu

_LANE = 128
_SUBLANE = 8
_TARGET_TILE_BYTES = 2 << 20     # ~2 MiB per input tile (double-buffered by the pipeline)
_ACC_ROWS_MAX = 512              # f32 accumulator rows, decoupled from the DMA tile
_NC = 2                          # parallel partials (feeds both v7x TensorCores)


def _round_up(n, m):
    return -(-n // m) * m


def _min_sublanes(dtype):
    """Minimum packed sublane multiple for a dtype: f32->8, bf16->16, int8/fp8->32."""
    itemsize = jnp.dtype(dtype).itemsize
    return _SUBLANE * max(1, 4 // itemsize)


def _layout_2d(total, shape):
    """Copy-free 2D (rows, cols) factorization of a contiguous `total`-element array."""
    if total % _LANE == 0:
        return total // _LANE, _LANE            # lane-dense: free reshape
    if len(shape) >= 2:
        return int(np.prod(shape[:-1], dtype=np.int64)), int(shape[-1])
    return 1, total                              # 1-D / scalar ragged fallback


def _pick_tile_rows(rows, cols, itemsizes, pack, block_rows=None):
    """Row-tile size: ~2 MiB per input, rounded to the dtype packing, clamped to the array."""
    if block_rows is not None:
        tr = _round_up(max(int(block_rows), pack), pack)
    else:
        bytes_per_row = max(1, cols * max(itemsizes))
        tr = max(pack, (_TARGET_TILE_BYTES // bytes_per_row) // pack * pack)
    tr = min(tr, _round_up(rows, pack))
    if tr >= rows:
        tr = rows            # single full-extent block (always a legal block shape)
    return tr


def _vmem_limit(tr, cols, itemsizes, acc_rows=0):
    tile = tr * cols
    footprint = sum(2 * tile * s for s in itemsizes) + acc_rows * cols * 4
    return int(min(max(32 << 20, 2 * footprint), 64 << 20))


# ---------------------------------------------------------------------------
# Kernel 1: fused weighted reduction (sum / mean).
#   grid = (_NC, steps_per_core), dimension_semantics = ("parallel", "arbitrary")
#   x_ref/w_ref : (tr, cols) VMEM tiles (w omitted entirely for scalar weights)
#   o_ref       : (8, cols) f32 partial stripe per parallel index (row 0 = partial sum)
#   acc_ref     : (acc_rows, cols) f32 VMEM accumulator, persists across the arbitrary axis
# ---------------------------------------------------------------------------
def _weighted_reduce_kernel(*refs, rows, tr, spc, acc_rows, scalar_weight, gen_mask):
    if scalar_weight:
        x_ref, o_ref, acc_ref = refs
        w_ref = None
    else:
        x_ref, w_ref, o_ref, acc_ref = refs

    c = pl.program_id(0)
    s = pl.program_id(1)

    @pl.when(s == 0)
    def _init():
        acc_ref[...] = jnp.zeros_like(acc_ref)

    row_start = (c * spc + s) * tr          # logical first row of this block
    n_chunks = tr // acc_rows
    cols = acc_ref.shape[1]

    def accumulate(masked):
        for k in range(n_chunks):           # static unroll: chunk the tile into the accumulator
            r0 = k * acc_rows
            x = x_ref[pl.ds(r0, acc_rows), :].astype(jnp.float32)
            if not scalar_weight:
                x = x * w_ref[pl.ds(r0, acc_rows), :].astype(jnp.float32)
            if masked:
                ridx = lax.broadcasted_iota(jnp.int32, (acc_rows, cols), 0)
                x = jnp.where(row_start + r0 + ridx < rows, x, 0.0)
            acc_ref[...] += x               # pure VPU, f32 accumulation

    if gen_mask:
        full = row_start + tr <= rows
        @pl.when(full)
        def _full():
            accumulate(False)
        @pl.when(jnp.logical_not(full))
        def _partial():
            accumulate(True)
    else:
        accumulate(False)

    @pl.when(s == pl.num_programs(1) - 1)
    def _finalize():
        colsum = jnp.sum(acc_ref[...], axis=0, keepdims=True)       # single XLU reduce -> (1, cols)
        sub = lax.broadcasted_iota(jnp.int32, (8, cols), 0)
        o_ref[...] = jnp.where(sub == 0, colsum, 0.0)                # partial in row 0, zeros below


# ---------------------------------------------------------------------------
# Kernel 2: fused weighted multiply ('none' reduction).
# ---------------------------------------------------------------------------
def _weighted_mul_kernel(x_ref, w_ref, o_ref, *, scalar_weight):
    x = x_ref[...].astype(jnp.float32)
    if scalar_weight:
        w = w_ref[0, 0]                      # f32 scalar from SMEM
    else:
        w = w_ref[...].astype(jnp.float32)
    o_ref[...] = (x * w).astype(o_ref.dtype)


def my_loss(x, weights=1.0, reduction="mean", block_rows=None):
    if reduction not in ("mean", "sum", "none"):
        raise ValueError(f"reduction method for {reduction.lower()} is not supported")

    x = jnp.asarray(x)
    w = jnp.asarray(weights)
    in_dtype = x.dtype
    out_shape_full = jnp.broadcast_shapes(x.shape, w.shape)
    total = int(np.prod(out_shape_full, dtype=np.int64))
    scalar_weight = bool(w.size == 1)

    # Copy-free 2D layout (no jnp.pad, no materialized flatten copy).
    rows, cols = _layout_2d(total, out_shape_full)
    if x.shape != out_shape_full:
        x = jnp.broadcast_to(x, out_shape_full)          # rare: weights broadcast x up
    x2d = x.reshape(rows, cols)

    itemsizes = [jnp.dtype(in_dtype).itemsize]
    pack = _min_sublanes(in_dtype)

    w2d = None
    if not scalar_weight:
        if w.shape != out_shape_full:
            # TODO(synk): express small broadcastable weights (e.g. per-channel) through the
            # BlockSpec index_map instead of materializing the broadcast in HBM.
            w = jnp.broadcast_to(w, out_shape_full)
        w2d = w.reshape(rows, cols)
        itemsizes.append(jnp.dtype(w.dtype).itemsize)
        pack = max(pack, _min_sublanes(w.dtype))

    tr = _pick_tile_rows(rows, cols, itemsizes, pack, block_rows)

    # ------------------------------------------------------------------ 'none'
    if reduction == "none":
        nsteps = pl.cdiv(rows, tr)
        if nsteps < 2 and rows > pack:
            # make sure the v7x megacore has at least two blocks to split across
            tr = _round_up(pl.cdiv(rows, 2), pack)
            nsteps = pl.cdiv(rows, tr)

        in_specs = [pl.BlockSpec((tr, cols), lambda i: (i, 0))]
        ops = [x2d]
        if scalar_weight:
            in_specs.append(pl.BlockSpec(memory_space=pltpu.MemorySpace.SMEM))
            ops.append(w.reshape(1, 1).astype(jnp.float32))
        else:
            in_specs.append(pl.BlockSpec((tr, cols), lambda i: (i, 0)))
            ops.append(w2d)

        bytes_accessed = total * (sum(itemsizes) + jnp.dtype(in_dtype).itemsize)
        out2d = pl.pallas_call(
            functools.partial(_weighted_mul_kernel, scalar_weight=scalar_weight),
            grid=(nsteps,),
            out_shape=jax.ShapeDtypeStruct((rows, cols), in_dtype),
            in_specs=in_specs,
            out_specs=pl.BlockSpec((tr, cols), lambda i: (i, 0)),
            compiler_params=pltpu.CompilerParams(
                dimension_semantics=("parallel",),
                vmem_limit_bytes=_vmem_limit(tr, cols, itemsizes)),
            cost_estimate=pl.CostEstimate(flops=total, transcendentals=0,
                                          bytes_accessed=int(bytes_accessed)),
        )(*ops)
        return out2d.reshape(out_shape_full)              # rows*cols == total: free view

    # ------------------------------------------------------------ 'sum' / 'mean'
    scale = (1.0 / total) if reduction == "mean" else 1.0

    nblocks = pl.cdiv(rows, tr)
    spc = pl.cdiv(nblocks, _NC)                           # arbitrary steps per parallel index
    gen_mask = not (rows % tr == 0 and nblocks % _NC == 0)
    acc_rows = _ACC_ROWS_MAX if tr % _ACC_ROWS_MAX == 0 else tr

    in_specs = [pl.BlockSpec((tr, cols), lambda c, s: (c * spc + s, 0))]
    ops = [x2d]
    if not scalar_weight:
        in_specs.append(pl.BlockSpec((tr, cols), lambda c, s: (c * spc + s, 0)))
        ops.append(w2d)

    kernel = functools.partial(
        _weighted_reduce_kernel, rows=rows, tr=tr, spc=spc,
        acc_rows=acc_rows, scalar_weight=scalar_weight, gen_mask=gen_mask)

    bytes_accessed = total * sum(itemsizes) + _NC * 8 * cols * 4
    partials = pl.pallas_call(
        kernel,
        grid=(_NC, spc),
        out_shape=jax.ShapeDtypeStruct((_NC * 8, cols), jnp.float32),
        in_specs=in_specs,
        out_specs=pl.BlockSpec((8, cols), lambda c, s: (c, 0)),
        scratch_shapes=[pltpu.VMEM((acc_rows, cols), jnp.float32)],
        compiler_params=pltpu.CompilerParams(
            dimension_semantics=("parallel", "arbitrary"),
            vmem_limit_bytes=_vmem_limit(tr, cols, itemsizes, acc_rows)),
        cost_estimate=pl.CostEstimate(flops=2 * total, transcendentals=0,
                                      bytes_accessed=int(bytes_accessed)),
    )(*ops)

    result = jnp.sum(partials) * scale                    # trivial (16, cols) f32 epilogue
    if scalar_weight:
        result = result * w.astype(jnp.float32).reshape(())  # fold scalar weight in once
    return result.astype(in_dtype)


# ---------------------------------------------------------------------------
# Pure-JAX reference (mirrors the PyTorch module)
# ---------------------------------------------------------------------------
def ref_my_loss(x, weights=1.0, reduction="mean"):
    x = jnp.asarray(x)
    p = x.astype(jnp.float32) * jnp.asarray(weights).astype(jnp.float32)
    if reduction == "mean":
        p = jnp.mean(p)
    elif reduction == "sum":
        p = jnp.sum(p)
    return p.astype(x.dtype)


# ---------------------------------------------------------------------------
if __name__ == "__main__":
    key = jax.random.PRNGKey(0)
    k1, k2, k3, k4, k5, k6 = jax.random.split(key, 6)

    x = jax.random.normal(k1, (2, 4, 16, 16), jnp.float32)
    w = jax.random.uniform(k2, (2, 4, 16, 16), jnp.float32)

    # 1) mean, full weight tensor (lane-dense layout, zero wrapper copies)
    out = jax.block_until_ready(my_loss(x, w, "mean"))
    np.testing.assert_allclose(np.asarray(out), np.asarray(ref_my_loss(x, w, "mean")),
                               rtol=1e-5, atol=1e-5)

    # 2) sum with small blocks (multi-block accumulator, static no-mask path)
    out = jax.block_until_ready(my_loss(x, w, "sum", block_rows=8))
    np.testing.assert_allclose(np.asarray(out), np.asarray(ref_my_loss(x, w, "sum")),
                               rtol=1e-5, atol=1e-4)

    # 3) 'none' reduction (fused elementwise kernel, parallel grid, >=2 blocks)
    out = jax.block_until_ready(my_loss(x, w, "none"))
    assert out.shape == x.shape and out.dtype == x.dtype, (out.shape, out.dtype)
    np.testing.assert_allclose(np.asarray(out), np.asarray(ref_my_loss(x, w, "none")),
                               rtol=1e-6, atol=1e-6)

    # 4) scalar weight: weight never enters the reduce kernel (folded into the epilogue)
    out = jax.block_until_ready(my_loss(x, 2.5, "mean"))
    np.testing.assert_allclose(np.asarray(out), np.asarray(ref_my_loss(x, 2.5, "mean")),
                               rtol=1e-5, atol=1e-5)
    out = jax.block_until_ready(my_loss(x, 2.5, "none"))
    np.testing.assert_allclose(np.asarray(out), np.asarray(ref_my_loss(x, 2.5, "none")),
                               rtol=1e-6, atol=1e-6)

    # 5) bf16 input: 16-sublane packed tiles, f32 accumulate, cast back to bf16
    xb, wb = x.astype(jnp.bfloat16), w.astype(jnp.bfloat16)
    out = jax.block_until_ready(my_loss(xb, wb, "mean"))
    ref = ref_my_loss(xb, wb, "mean")
    np.testing.assert_allclose(np.asarray(out.astype(jnp.float32)),
                               np.asarray(ref.astype(jnp.float32)), rtol=2e-2, atol=2e-2)

    # 6) ragged total (105 elements, not a multiple of 128): in-kernel masking, no pad copy
    xr = jax.random.normal(k3, (3, 5, 7), jnp.float32)
    wr = jax.random.uniform(k4, (3, 5, 7), jnp.float32)
    out = jax.block_until_ready(my_loss(xr, wr, "sum"))
    np.testing.assert_allclose(np.asarray(out), np.asarray(ref_my_loss(xr, wr, "sum")),
                               rtol=1e-5, atol=1e-4)
    out = jax.block_until_ready(my_loss(xr, wr, "none"))
    np.testing.assert_allclose(np.asarray(out), np.asarray(ref_my_loss(xr, wr, "none")),
                               rtol=1e-6, atol=1e-6)

    # 7) larger tile: chunked accumulator + multi-step arbitrary axis per core
    xm = jax.random.normal(k5, (2, 4, 128, 128), jnp.float32)
    wm = jax.random.uniform(k6, (2, 4, 128, 128), jnp.float32)
    out = jax.block_until_ready(my_loss(xm, wm, "mean"))
    np.testing.assert_allclose(np.asarray(out), np.asarray(ref_my_loss(xm, wm, "mean")),
                               rtol=1e-5, atol=1e-5)
    out = jax.block_until_ready(my_loss(xm, wm, "sum", block_rows=64))
    np.testing.assert_allclose(np.asarray(out), np.asarray(ref_my_loss(xm, wm, "sum")),
                               rtol=1e-4, atol=5e-2)

    # 8) broadcastable (per-channel) weights: correct via wrapper broadcast fallback
    wc = jax.random.uniform(k4, (1, 4, 1, 1), jnp.float32)
    out = jax.block_until_ready(my_loss(x, wc, "mean"))
    np.testing.assert_allclose(np.asarray(out), np.asarray(ref_my_loss(x, wc, "mean")),
                               rtol=1e-5, atol=1e-5)

    print("KERNEL_OK")
</pallas_src>

<mosaic_0001>
module attributes {stable_mosaic.version = 11 : i64} {
  func.func @_weighted_reduce_kernel(%arg0: i32, %arg1: i32, %arg2: memref<16x128xf32, #tpu.memory_space<vmem>>, %arg3: memref<16x128xf32, #tpu.memory_space<vmem>>, %arg4: memref<8x128xf32, #tpu.memory_space<vmem>>, %arg5: memref<16x128xf32, #tpu.memory_space<vmem>>) attributes {dimension_semantics = [#tpu.dimension_semantics<parallel>, #tpu.dimension_semantics<arbitrary>], iteration_bounds = array<i64: 2, 1>, scalar_prefetch = 0 : i64, scratch_operands = 1 : i64, tpu.core_type = #tpu.core_type<tc>, window_params = [{transform_indices = @transform_0, window_bounds = array<i64: 16, 128>}, {transform_indices = @transform_1, window_bounds = array<i64: 16, 128>}, {transform_indices = @transform_2, window_bounds = array<i64: 8, 128>}]} {
    %c0_i32 = arith.constant 0 : i32
    %0 = arith.cmpi eq, %arg1, %c0_i32 : i32
    %1 = arith.extui %0 : i1 to i32
    %c0_i32_0 = arith.constant 0 : i32
    %2 = arith.cmpi ne, %1, %c0_i32_0 : i32
    scf.if %2 {
      %cst = arith.constant 0.000000e+00 : f32
      %16 = vector.broadcast %cst : f32 to vector<16x128xf32>
      %c0 = arith.constant 0 : index
      %c0_7 = arith.constant 0 : index
      %17 = vector.load %arg5[%c0, %c0_7] : memref<16x128xf32, #tpu.memory_space<vmem>>, vector<16x128xf32>
      tpu.vector_store %arg5[%c0, %c0_7], %16 {strides = array<i32>} : memref<16x128xf32, #tpu.memory_space<vmem>>, vector<16x128xf32>,
    } else {
    }
    %c1_i32 = arith.constant 1 : i32
    %3 = arith.muli %arg0, %c1_i32 : i32
    %4 = arith.addi %3, %arg1 : i32
    %c16_i32 = arith.constant 16 : i32
    %5 = arith.muli %4, %c16_i32 : i32
    %c16_i32_1 = arith.constant 16 : i32
    %6 = arith.addi %5, %c16_i32_1 : i32
    %c16_i32_2 = arith.constant 16 : i32
    %7 = arith.cmpi sle, %6, %c16_i32_2 : i32
    %8 = arith.extui %7 : i1 to i32
    %c0_i32_3 = arith.constant 0 : i32
    %9 = arith.cmpi ne, %8, %c0_i32_3 : i32
    scf.if %9 {
      %c0 = arith.constant 0 : index
      %c0_7 = arith.constant 0 : index
      %16 = vector.load %arg2[%c0, %c0_7] : memref<16x128xf32, #tpu.memory_space<vmem>>, vector<16x128xf32>
      %c0_8 = arith.constant 0 : index
      %c0_9 = arith.constant 0 : index
      %17 = vector.load %arg3[%c0_8, %c0_9] : memref<16x128xf32, #tpu.memory_space<vmem>>, vector<16x128xf32>
      %18 = arith.mulf %16, %17 : vector<16x128xf32>
      %c0_10 = arith.constant 0 : index
      %c0_11 = arith.constant 0 : index
      %19 = vector.load %arg5[%c0_10, %c0_11] : memref<16x128xf32, #tpu.memory_space<vmem>>, vector<16x128xf32>
      %20 = arith.addf %19, %18 : vector<16x128xf32>
      %c0_12 = arith.constant 0 : index
      %c0_13 = arith.constant 0 : index
      %21 = vector.load %arg5[%c0_12, %c0_13] : memref<16x128xf32, #tpu.memory_space<vmem>>, vector<16x128xf32>
      tpu.vector_store %arg5[%c0_12, %c0_13], %20 {strides = array<i32>} : memref<16x128xf32, #tpu.memory_space<vmem>>, vector<16x128xf32>,
    } else {
    }
    %true = arith.constant true
    %10 = arith.xori %7, %true : i1
    %11 = arith.extui %10 : i1 to i32
    %c0_i32_4 = arith.constant 0 : i32
    %12 = arith.cmpi ne, %11, %c0_i32_4 : i32
    scf.if %12 {
      %c0 = arith.constant 0 : index
      %c0_7 = arith.constant 0 : index
      %16 = vector.load %arg2[%c0, %c0_7] : memref<16x128xf32, #tpu.memory_space<vmem>>, vector<16x128xf32>
      %c0_8 = arith.constant 0 : index
      %c0_9 = arith.constant 0 : index
      %17 = vector.load %arg3[%c0_8, %c0_9] : memref<16x128xf32, #tpu.memory_space<vmem>>, vector<16x128xf32>
      %18 = arith.mulf %16, %17 : vector<16x128xf32>
      %19 = tpu.iota {dimensions = array<i32: 0>} : vector<16x128xi32>
      %c0_i32_10 = arith.constant 0 : i32
      %20 = arith.addi %5, %c0_i32_10 : i32
      %21 = vector.broadcast %20 : i32 to vector<16x128xi32>
      %22 = arith.addi %21, %19 : vector<16x128xi32>
      %c16_i32_11 = arith.constant 16 : i32
      %23 = vector.broadcast %c16_i32_11 : i32 to vector<16x128xi32>
      %24 = arith.cmpi slt, %22, %23 : vector<16x128xi32>
      %cst = arith.constant 0.000000e+00 : f32
      %25 = vector.broadcast %cst : f32 to vector<16x128xf32>
      %26 = arith.select %24, %18, %25 : vector<16x128xi1>, vector<16x128xf32>
      %c0_12 = arith.constant 0 : index
      %c0_13 = arith.constant 0 : index
      %27 = vector.load %arg5[%c0_12, %c0_13] : memref<16x128xf32, #tpu.memory_space<vmem>>, vector<16x128xf32>
      %28 = arith.addf %27, %26 : vector<16x128xf32>
      %c0_14 = arith.constant 0 : index
      %c0_15 = arith.constant 0 : index
      %29 = vector.load %arg5[%c0_14, %c0_15] : memref<16x128xf32, #tpu.memory_space<vmem>>, vector<16x128xf32>
      tpu.vector_store %arg5[%c0_14, %c0_15], %28 {strides = array<i32>} : memref<16x128xf32, #tpu.memory_space<vmem>>, vector<16x128xf32>,
    } else {
    }
    %c0_i32_5 = arith.constant 0 : i32
    %13 = arith.cmpi eq, %arg1, %c0_i32_5 : i32
    %14 = arith.extui %13 : i1 to i32
    %c0_i32_6 = arith.constant 0 : i32
    %15 = arith.cmpi ne, %14, %c0_i32_6 : i32
    scf.if %15 {
      %c0 = arith.constant 0 : index
      %c0_7 = arith.constant 0 : index
      %16 = vector.load %arg5[%c0, %c0_7] : memref<16x128xf32, #tpu.memory_space<vmem>>, vector<16x128xf32>
      %cst = arith.constant dense<0.000000e+00> : vector<128xf32>
      %17 = vector.multi_reduction <add>, %16, %cst [0] : vector<16x128xf32> to vector<128xf32>
      %18 = vector.shape_cast %17 : vector<128xf32> to vector<1x128xf32>
      %19 = tpu.iota {dimensions = array<i32: 0>} : vector<8x128xi32>
      %c0_i32_8 = arith.constant 0 : i32
      %20 = vector.broadcast %c0_i32_8 : i32 to vector<8x128xi32>
      %21 = arith.cmpi eq, %19, %20 : vector<8x128xi32>
      %cst_9 = arith.constant 0.000000e+00 : f32
      %22 = vector.shape_cast %18 : vector<1x128xf32> to vector<1x128xf32>
      %23 = vector.broadcast %22 : vector<1x128xf32> to vector<8x128xf32>
      %24 = vector.broadcast %cst_9 : f32 to vector<8x128xf32>
      %25 = arith.select %21, %23, %24 : vector<8x128xi1>, vector<8x128xf32>
      %c0_10 = arith.constant 0 : index
      %c0_11 = arith.constant 0 : index
      %26 = vector.load %arg4[%c0_10, %c0_11] : memref<8x128xf32, #tpu.memory_space<vmem>>, vector<8x128xf32>
      tpu.vector_store %arg4[%c0_10, %c0_11], %25 {strides = array<i32>} : memref<8x128xf32, #tpu.memory_space<vmem>>, vector<8x128xf32>,
    } else {
    }
    return
  }
  func.func @transform_0(%arg0: i32, %arg1: i32) -> (i32, i32) {
    %c1_i32 = arith.constant 1 : i32
    %0 = arith.muli %arg0, %c1_i32 : i32
    %1 = arith.addi %0, %arg1 : i32
    %c0_i32 = arith.constant 0 : i32
    %c0_i32_0 = arith.constant 0 : i32
    return %1, %c0_i32 : i32, i32
  }
  func.func @transform_1(%arg0: i32, %arg1: i32) -> (i32, i32) {
    %c1_i32 = arith.constant 1 : i32
    %0 = arith.muli %arg0, %c1_i32 : i32
    %1 = arith.addi %0, %arg1 : i32
    %c0_i32 = arith.constant 0 : i32
    %c0_i32_0 = arith.constant 0 : i32
    return %1, %c0_i32 : i32, i32
  }
  func.func @transform_2(%arg0: i32, %arg1: i32) -> (i32, i32) {
    %c0_i32 = arith.constant 0 : i32
    %c0_i32_0 = arith.constant 0 : i32
    return %arg0, %c0_i32 : i32, i32
  }
}

</mosaic_0001>

<llo_original>
// kernel: tpu_custom_call.1
$region0: #{tpu_custom_call.1}
  #allocation0 [shape = 'u32[]', space=smem, size = 0x4, offset = 0x4, fixed_abs, tag = 'smem constant byte address 0x4 - core index']
  #allocation1 [shape = 'u32[144,128]{1,0:T(1,128)}', space=vmem, size = 0x12000, scoped, tag = 'internal scratch']
  #allocation2 [shape = 'f32[16,128]{1,0:T(8,128)}', space=vmem, size = 0x2000, scoped, tag = 'scratch operand']
  %s0 = inlined_call_operand.hbm [shape: f32[16,128], index: 0, kind: input, shape index: {}]
  %s1 = inlined_call_operand.hbm [shape: f32[16,128], index: 1, kind: input, shape index: {}]
  %s2 = inlined_call_operand.hbm [shape: f32[16,128], index: 2, kind: output, shape index: {}]
  %s3 = sld [smem:[#allocation0]]
  $region65: #{tpu_custom_call.1} parent=0
    _
  %s5 = ssub.s32 1, %s3
  %s6 = scalar_select 0, %s5, %s3
  $region1: #{tpu_custom_call.1} parent=0
    #allocation3 [shape = 'u8[16384]{0}', space=vmem, size = 0x4000, scoped, tag = 'input window, operand 0']
    #allocation4 [shape = 's32[2]{0}', space=sflag, size = 0x8, scoped, tag = 'scoped memory for tpu_custom_call.1']
    #allocation5 [shape = 's32[2]{0}', space=sflag, size = 0x8, scoped, tag = 'scoped memory for tpu_custom_call.1']
    #allocation6 [shape = 'u8[16384]{0}', space=vmem, size = 0x4000, scoped, tag = 'input window, operand 1']
    #allocation7 [shape = 's32[2]{0}', space=sflag, size = 0x8, scoped, tag = 'scoped memory for tpu_custom_call.1']
    #allocation8 [shape = 'u8[8192]{0}', space=vmem, size = 0x2000, scoped, tag = 'output window, operand 0']
    %7 = vsyncpa [#allocation4], 0
    %s8 = scalar_lea.sflag [#allocation4], 1
    %9 = vsyncpa %s8, 0
    %10 = vsyncpa [#allocation7], 0
    %s11 = scalar_lea.sflag [#allocation7], 1
    %12 = vsyncpa %s11, 0
    %13 = vsyncpa [#allocation5], 0
    %s14 = scalar_lea.sflag [#allocation5], 1
    %15 = vsyncpa %s14, 0
    loop: start=0, step=1, limit=4
    $region2: #{tpu_custom_call.1} parent=1 // loop_pre_header
      _
    $region3: #{tpu_custom_call.1} parent=1 // loop_header
      %s17 = sphi 0, %s21
      %p18 = scmp.ge.s32.totalorder %s17, 4
      %s24 = sphi 0, %s36
      %s25 = sphi 0, %s32
      %s26 = sphi 0, %s24
      %s27 = sphi 0, %s25
      %s28 = sphi 0, %s26
      %s29 = sphi 0, %s27
      %s41 = sphi 0, %s43
      %s44 = sphi 0, %s41
      %s45 = sphi 0, %s44
      %s61 = sphi 0, %s45
      %s69 = sphi 0, %s71
      %s72 = sphi 0, %s69
      %s73 = sphi 0, %s72
      %s89 = sphi 0, %s73
      %s95 = sphi 0, %s97
      %s98 = sphi 0, %s95
      %s99 = sphi 0, %s98
      %s115 = sphi 0, %s99
    $region4: #{tpu_custom_call.1} parent=1 // loop_header_branch
      %20 = sbr.rel (%p18) target = $region8
    $region5: #{tpu_custom_call.1} parent=1 // loop_body
      %s22 = ssub.s32 %s17, 1
      %s23 = ssub.s32 %s17, 2
      %s30 = sadd.s32 1, %s25
      %p31 = scmp.ge.s32.totalorder %s30, 1
      %s32 = scalar_select %p31, 0, %s30
      %s33 = sadd.s32 1, %s24
      %s34 = scalar_select %p31, %s33, %s24
      %p35 = scmp.ge.s32.totalorder %s34, 2
      %s36 = scalar_select %p35, 0, %s34
      %s37 = sadd.s32 %s24, %s25
      %s38 = sadd.s32 %s36, %s32
      %s39 = ssub.s32 %s37, %s38
      %p40 = scmp.eq.s32.totalorder %s39, 0
      %s42 = sadd.s32 %s41, 1
      %s43 = scalar_select %p40, %s41, %s42
      %p46 = pneg %p40
      %p47 = scmp.eq.s32.totalorder %s17, 1
      %p48 = por %p46, %p47
      %p49 = scmp.ne.s32.totalorder %s41, %s44
      %p50 = scmp.eq.s32.totalorder %s17, 0
      %p51 = por %p49, %p50
      %p52 = scmp.ne.s32.totalorder %s41, %s44
      %p53 = scmp.eq.s32.totalorder %s22, 1
      %p54 = por %p52, %p53
      %p55 = scmp.ne.s32.totalorder %s44, %s45
      %p56 = scmp.eq.s32.totalorder %s22, 0
      %p57 = por %p55, %p56
      %p58 = scmp.ne.s32.totalorder %s44, %s45
      %p59 = scmp.eq.s32.totalorder %s23, 1
      %p60 = por %p58, %p59
      %p62 = scmp.ne.s32.totalorder %s45, %s61
      %p63 = scmp.eq.s32.totalorder %s23, 0
      %p64 = por %p62, %p63
      %s65 = sadd.s32 %s24, %s25
      %s66 = sadd.s32 %s36, %s32
      %s67 = ssub.s32 %s65, %s66
      %p68 = scmp.eq.s32.totalorder %s67, 0
      %s70 = sadd.s32 %s69, 1
      %s71 = scalar_select %p68, %s69, %s70
      %p74 = pneg %p68
      %p75 = scmp.eq.s32.totalorder %s17, 1
      %p76 = por %p74, %p75
      %p77 = scmp.ne.s32.totalorder %s69, %s72
      %p78 = scmp.eq.s32.totalorder %s17, 0
      %p79 = por %p77, %p78
      %p80 = scmp.ne.s32.totalorder %s69, %s72
      %p81 = scmp.eq.s32.totalorder %s22, 1
      %p82 = por %p80, %p81
      %p83 = scmp.ne.s32.totalorder %s72, %s73
      %p84 = scmp.eq.s32.totalorder %s22, 0
      %p85 = por %p83, %p84
      %p86 = scmp.ne.s32.totalorder %s72, %s73
      %p87 = scmp.eq.s32.totalorder %s23, 1
      %p88 = por %p86, %p87
      %p90 = scmp.ne.s32.totalorder %s73, %s89
      %p91 = scmp.eq.s32.totalorder %s23, 0
      %p92 = por %p90, %p91
      %s93 = ssub.s32 %s24, %s36
      %p94 = scmp.eq.s32.totalorder %s93, 0
      %s96 = sadd.s32 %s95, 1
      %s97 = scalar_select %p94, %s95, %s96
      %p100 = pneg %p94
      %p101 = scmp.eq.s32.totalorder %s17, 1
      %p102 = por %p100, %p101
      %p103 = scmp.ne.s32.totalorder %s95, %s98
      %p104 = scmp.eq.s32.totalorder %s17, 0
      %p105 = por %p103, %p104
      %p106 = scmp.ne.s32.totalorder %s95, %s98
      %p107 = scmp.eq.s32.totalorder %s22, 1
      %p108 = por %p106, %p107
      %p109 = scmp.ne.s32.totalorder %s98, %s99
      %p110 = scmp.eq.s32.totalorder %s22, 0
      %p111 = por %p109, %p110
      %p112 = scmp.ne.s32.totalorder %s98, %s99
      %p113 = scmp.eq.s32.totalorder %s23, 1
      %p114 = por %p112, %p113
      %p116 = scmp.ne.s32.totalorder %s99, %s115
      %p117 = scmp.eq.s32.totalorder %s23, 0
      %p118 = por %p116, %p117
      %p119 = scmp.le.s32.totalorder 1, %s17
      %p120 = scmp.lt.s32.totalorder %s17, 3
      %p121 = pnand %p119, %p120
      %p122 = pneg %p121
      // Predicated region
      $region9: #{tpu_custom_call.1} parent=5 // pred_check
        _
      $region10: #{tpu_custom_call.1} parent=5 // pred_check_branch
        %124 = sbr.rel (%p121) target = $region12
      $region11: #{tpu_custom_call.1} parent=5 // pred_region
        %s125 = ssub.s32 %s17, 1
      $region12: #{tpu_custom_call.1} parent=5 // pred_fallthru
        _
      %p126 = scmp.lt.s32.totalorder %s17, 2
      // Predicated region
      $region13: #{tpu_custom_call.1} parent=5 // pred_check
        %p127 = pneg %p126
      $region14: #{tpu_custom_call.1} parent=5 // pred_check_branch
        %129 = sbr.rel (%p127) target = $region16
      $region15: #{tpu_custom_call.1} parent=5 // pred_region
        // Predicated region
        $region17: #{tpu_custom_call.1} parent=15 // pred_check
          %p130 = pneg %p51
        $region18: #{tpu_custom_call.1} parent=15 // pred_check_branch
          %132 = sbr.rel (%p130) target = $region20
        $region19: #{tpu_custom_call.1} parent=15 // pred_region
          %s133 = sand.u32 %s41, 1
          %s134 = scalar_lea.sflag [#allocation4], %s133
          %s135 = sand.u32 %s41, 1
          %s136 = smul.addr %s135, 16
          %s137 = scalar_lea.vmem [#allocation3], %s136
          %s138 = sadd.s32 %s24, %s25
          %s139 = smul.u32 2, %s138
          %s141 = ssub.s32 256, 256
          %142 = vsyncadd %s134, %s141
          %s143 = smul.addr %s139, 128
          %s144 = scalar_lea.hbm %s0, %s143
          %s145 = sshll.u32 %s137, 4
          %s146 = int_to_ptr.vmem [resolvable:$true] %s145
          %151 = dma.hbm_to_vmem [thread:$0]  %s144, 256, %s146, %s134, 128, 128, 8
        $region20: #{tpu_custom_call.1} parent=15 // pred_fallthru
          _
        // Predicated region
        $region21: #{tpu_custom_call.1} parent=15 // pred_check
          %p152 = pneg %p79
        $region22: #{tpu_custom_call.1} parent=15 // pred_check_branch
          %154 = sbr.rel (%p152) target = $region24
        $region23: #{tpu_custom_call.1} parent=15 // pred_region
          %s155 = sand.u32 %s69, 1
          %s156 = scalar_lea.sflag [#allocation7], %s155
          %s157 = sand.u32 %s69, 1
          %s158 = smul.addr %s157, 16
          %s159 = scalar_lea.vmem [#allocation6], %s158
          %s160 = sadd.s32 %s24, %s25
          %s161 = smul.u32 2, %s160
          %s163 = ssub.s32 256, 256
          %164 = vsyncadd %s156, %s163
          %s165 = smul.addr %s161, 128
          %s166 = scalar_lea.hbm %s1, %s165
          %s167 = sshll.u32 %s159, 4
          %s168 = int_to_ptr.vmem [resolvable:$true] %s167
          %173 = dma.hbm_to_vmem [thread:$0]  %s166, 256, %s168, %s156, 128, 128, 8
        $region24: #{tpu_custom_call.1} parent=15 // pred_fallthru
          _
      $region16: #{tpu_custom_call.1} parent=5 // pred_fallthru
        _
      %p174 = scmp.le.s32.totalorder 1, %s17
      %p175 = scmp.lt.s32.totalorder %s17, 3
      %p176 = pnand %p174, %p175
      %p177 = pneg %p176
      // Predicated region
      $region25: #{tpu_custom_call.1} parent=5 // pred_check
        _
      $region26: #{tpu_custom_call.1} parent=5 // pred_check_branch
        %179 = sbr.rel (%p176) target = $region28
      $region27: #{tpu_custom_call.1} parent=5 // pred_region
        %s180 = ssub.s32 %s17, 1
        %s181 = sand.u32 %s44, 1
        %s182 = scalar_lea.sflag [#allocation4], %s181
        %s183 = sand.u32 %s44, 1
        %s184 = smul.addr %s183, 16
        %s185 = scalar_lea.vmem [#allocation3], %s184
        // Predicated region
        $region29: #{tpu_custom_call.1} parent=27 // pred_check
          %p186 = pneg %p57
        $region30: #{tpu_custom_call.1} parent=27 // pred_check_branch
          %188 = sbr.rel (%p186) target = $region32
        $region31: #{tpu_custom_call.1} parent=27 // pred_region
          %189 = dma.done %s182, 256
        $region32: #{tpu_custom_call.1} parent=27 // pred_fallthru
          _
        %s190 = sand.u32 %s72, 1
        %s191 = scalar_lea.sflag [#allocation7], %s190
        %s192 = sand.u32 %s72, 1
        %s193 = smul.addr %s192, 16
        %s194 = scalar_lea.vmem [#allocation6], %s193
        // Predicated region
        $region33: #{tpu_custom_call.1} parent=27 // pred_check
          %p195 = pneg %p85
        $region34: #{tpu_custom_call.1} parent=27 // pred_check_branch
          %197 = sbr.rel (%p195) target = $region36
        $region35: #{tpu_custom_call.1} parent=27 // pred_region
          %198 = dma.done %s191, 256
        $region36: #{tpu_custom_call.1} parent=27 // pred_fallthru
          _
        %s199 = sand.u32 %s44, 1
        %s200 = scalar_lea.sflag [#allocation4], %s199
        %s201 = sand.u32 %s44, 1
        %s202 = smul.addr %s201, 16
        %s203 = scalar_lea.vmem [#allocation3], %s202
        %p204 = pneg %p57
        %p205 = pneg %p54
        %s206 = sand.u32 %s72, 1
        %s207 = scalar_lea.sflag [#allocation7], %s206
        %s208 = sand.u32 %s72, 1
        %s209 = smul.addr %s208, 16
        %s210 = scalar_lea.vmem [#allocation6], %s209
        %p211 = pneg %p85
        %p212 = pneg %p82
        %p213 = pneg %p111
        %p214 = pneg %p108
        %s215 = sand.u32 %s98, 1
        %s216 = scalar_lea.sflag [#allocation5], %s215
        %s217 = sand.u32 %s98, 1
        %s218 = smul.addr %s217, 8
        %s219 = scalar_lea.vmem [#allocation8], %s218
        %s220 = sadd.s32 %s26, %s27
        %s221 = smul.u32 2, %s220
        %s222 = sadd.s32 %s26, %s27
        %s223 = smul.u32 2, %s222
        %p224 = scmp.eq.s32.totalorder %s27, 0
        // Predicated region
        $region37: #{tpu_custom_call.1} parent=27 // pred_check
          %p225 = pneg %p224
        $region38: #{tpu_custom_call.1} parent=27 // pred_check_branch
          %227 = sbr.rel (%p225) target = $region40
        $region39: #{tpu_custom_call.1} parent=27 // pred_region
          %228 = vst [vmem:[#allocation2] sm:$0xff] 0.0
          %229 = vst [vmem:[#allocation2 + $0x8] sm:$0xff] 0.0
        $region40: #{tpu_custom_call.1} parent=27 // pred_fallthru
          _
        %s230 = sadd.s32 %s26, %s27
        %s231 = smul.u32 %s230, 16
        %s232 = sadd.s32 %s231, 16
        %p233 = scmp.le.s32.totalorder %s232, 16
        // Predicated region
        $region41: #{tpu_custom_call.1} parent=27 // pred_check
          %p234 = pneg %p233
        $region42: #{tpu_custom_call.1} parent=27 // pred_check_branch
          %236 = sbr.rel (%p234) target = $region44
        $region43: #{tpu_custom_call.1} parent=27 // pred_region
          %v237 = vld [vmem:[%s185] sm:$0xff]
          %v238 = vld [vmem:[%s185 + $0x8] sm:$0xff]
          %v239 = vld [vmem:[%s194] sm:$0xff]
          %v240 = vld [vmem:[%s194 + $0x8] sm:$0xff]
          %v241 = vmul.f32 %v237, %v239
          %v242 = vmul.f32 %v238, %v240
          %v243 = vld [vmem:[#allocation2] sm:$0xff]
          %v244 = vld [vmem:[#allocation2 + $0x8] sm:$0xff]
          %v245 = vadd.f32 %v243, %v241
          %v246 = vadd.f32 %v244, %v242
          %247 = vst [vmem:[#allocation2] sm:$0xff] %v245
          %248 = vst [vmem:[#allocation2 + $0x8] sm:$0xff] %v246
        $region44: #{tpu_custom_call.1} parent=27 // pred_fallthru
          _
        %p249 = scmp.gt.s32.totalorder %s232, 16
        // Predicated region
        $region45: #{tpu_custom_call.1} parent=27 // pred_check
          %p250 = pneg %p249
        $region46: #{tpu_custom_call.1} parent=27 // pred_check_branch
          %252 = sbr.rel (%p250) target = $region48
        $region47: #{tpu_custom_call.1} parent=27 // pred_region
          %v253 = vld [vmem:[%s185] sm:$0xff]
          %v254 = vld [vmem:[%s185 + $0x8] sm:$0xff]
          %v255 = vld [vmem:[%s194] sm:$0xff]
          %v256 = vld [vmem:[%s194 + $0x8] sm:$0xff]
          %v257 = vmul.f32 %v253, %v255
          %v258 = vmul.f32 %v254, %v256
          %v259 = vlaneseq
          %v260 = vshrl.u32 %v259, 7
          %v261 = vadd.s32 %v260, 8
          %v262 = vstv %s231
          %v263 = vadd.s32 %v262, %v260
          %v264 = vadd.s32 %v262, %v261
          %vm265 = vcmp.lt.s32.totalorder %v263, 16
          %vm266 = vcmp.lt.s32.totalorder %v264, 16
          %v267 = vsel %vm265, %v257, 0.0
          %v268 = vsel %vm266, %v258, 0.0
          %v269 = vld [vmem:[#allocation2] sm:$0xff]
          %v270 = vld [vmem:[#allocation2 + $0x8] sm:$0xff]
          %v271 = vadd.f32 %v269, %v267
          %v272 = vadd.f32 %v270, %v268
          %273 = vst [vmem:[#allocation2] sm:$0xff] %v271
          %274 = vst [vmem:[#allocation2 + $0x8] sm:$0xff] %v272
        $region48: #{tpu_custom_call.1} parent=27 // pred_fallthru
          _
        // Predicated region
        $region49: #{tpu_custom_call.1} parent=27 // pred_check
          %p275 = pneg %p224
        $region50: #{tpu_custom_call.1} parent=27 // pred_check_branch
          %277 = sbr.rel (%p275) target = $region52
        $region51: #{tpu_custom_call.1} parent=27 // pred_region
          %v278 = vld [vmem:[#allocation2] sm:$0xff]
          %v279 = vld [vmem:[#allocation2 + $0x8] sm:$0xff]
          %v280 = vadd.f32 %v278, %v279
          %v281 = vrot.slane %v280, 4
          %v282 = vadd.f32 %v280, %v281
          %v283 = vrot.slane %v282, 2
          %v284 = vadd.f32 %v282, %v283
          %v285 = vrot.slane %v284, 1
          %v286 = vadd.f32 %v284, %v285
          %v287 = vlaneseq
          %v288 = vshrl.u32 %v287, 7
          %vm289 = vcmp.eq.s32.totalorder %v288, 0
          %v290 = vsel %vm289, %v286, 0.0
          %291 = vst [vmem:[%s219] sm:$0xff] %v290
        $region52: #{tpu_custom_call.1} parent=27 // pred_fallthru
          _
        %s292 = sand.u32 %s98, 1
        %s293 = scalar_lea.sflag [#allocation5], %s292
        %s294 = sand.u32 %s98, 1
        %s295 = smul.addr %s294, 8
        %s296 = scalar_lea.vmem [#allocation8], %s295
        // Predicated region
        $region53: #{tpu_custom_call.1} parent=27 // pred_check
          %p297 = pneg %p108
        $region54: #{tpu_custom_call.1} parent=27 // pred_check_branch
          %299 = sbr.rel (%p297) target = $region56
        $region55: #{tpu_custom_call.1} parent=27 // pred_region
          %s301 = ssub.s32 128, 128
          %302 = vsyncadd %s293, %s301
          %s303 = smul.addr %s26, 128
          %s304 = scalar_lea.hbm %s2, %s303
          %s306 = sshll.u32 %s296, 4
          %s307 = int_to_ptr.vmem [resolvable:$true] %s306
          %309 = dma.vmem_to_hbm [thread:$0]  %s307, 128, %s304, %s293
        $region56: #{tpu_custom_call.1} parent=27 // pred_fallthru
          _
      $region28: #{tpu_custom_call.1} parent=5 // pred_fallthru
        _
      %p310 = scmp.le.s32.totalorder 2, %s17
      // Predicated region
      $region57: #{tpu_custom_call.1} parent=5 // pred_check
        %p311 = pneg %p310
      $region58: #{tpu_custom_call.1} parent=5 // pred_check_branch
        %313 = sbr.rel (%p311) target = $region60
      $region59: #{tpu_custom_call.1} parent=5 // pred_region
        %s314 = ssub.s32 %s17, 2
        // Predicated region
        $region61: #{tpu_custom_call.1} parent=59 // pred_check
          %p315 = pneg %p114
        $region62: #{tpu_custom_call.1} parent=59 // pred_check_branch
          %317 = sbr.rel (%p315) target = $region64
        $region63: #{tpu_custom_call.1} parent=59 // pred_region
          %s318 = sand.u32 %s99, 1
          %s319 = scalar_lea.sflag [#allocation5], %s318
          %s320 = sand.u32 %s99, 1
          %s321 = smul.addr %s320, 8
          %s322 = scalar_lea.vmem [#allocation8], %s321
          %323 = dma.done %s319, 128
        $region64: #{tpu_custom_call.1} parent=59 // pred_fallthru
          _
      $region60: #{tpu_custom_call.1} parent=5 // pred_fallthru
        _
    $region6: #{tpu_custom_call.1} parent=1 // loop_footer
      %s21 = sadd.s32 1, %s17
    $region7: #{tpu_custom_call.1} parent=1 // loop_footer_branch
      %16 = sbr.rel target = $region3
    $region8: #{tpu_custom_call.1} parent=1 // loop_exit
      _
    %324 = vsyncpa [#allocation4], 1
    %s325 = scalar_lea.sflag [#allocation4], 1
    %326 = vsyncpa %s325, 1
    %327 = vsyncpa [#allocation7], 1
    %s328 = scalar_lea.sflag [#allocation7], 1
    %329 = vsyncpa %s328, 1
    %330 = vsyncpa [#allocation5], 1
    %s331 = scalar_lea.sflag [#allocation5], 1
    %332 = vsyncpa %s331, 1

</llo_original>
